<compile_context>
chip_gen: v5e
topology: v5e:2x2
jax: 0.10.0
libtpu: 0.0.40
codegen_flags: <defaults>
</compile_context>

<pallas_src>
import jax
import jax.numpy as jnp
from jax import lax
from jax.experimental import pallas as pl
from jax.experimental.pallas import tpu as pltpu

_LN_EPS = 1e-5


def _round_up(a: int, b: int) -> int:
    return ((a + b - 1) // b) * b


# ---------------------------------------------------------------------------
# Kernel: one M-tile of the fused MLP.  bf16 MXU matmuls, f32 epilogue math.
# ---------------------------------------------------------------------------
def _object_encoder_kernel(x_ref, w1_ref, b1_ref, w2_ref, b2_ref,
                           g_ref, beta_ref, w3_ref, b3_ref, o_ref):
    # l1 + sigmoid  (x and w1 are bf16; accumulate in f32)
    h = jnp.dot(x_ref[...], w1_ref[...], preferred_element_type=jnp.float32)
    h = jax.nn.sigmoid(h + b1_ref[...])

    # l2 + sigmoid
    h = jnp.dot(h.astype(jnp.bfloat16), w2_ref[...],
                preferred_element_type=jnp.float32)
    h = jax.nn.sigmoid(h + b2_ref[...])

    # LayerNorm over the 256 feature lanes (biased variance, torch semantics)
    mean = jnp.mean(h, axis=-1, keepdims=True)
    c = h - mean
    var = jnp.mean(c * c, axis=-1, keepdims=True)
    hn = c * lax.rsqrt(var + _LN_EPS)
    hn = hn * g_ref[...] + beta_ref[...]

    # l3
    o = jnp.dot(hn.astype(jnp.bfloat16), w3_ref[...],
                preferred_element_type=jnp.float32)
    o_ref[...] = (o + b3_ref[...]).astype(o_ref.dtype)


def object_encoder_pallas(x_flat, w1, b1, w2, b2, gamma, beta, w3, b3, *, tm):
    """x_flat: [M, 25] bf16 (M multiple of tm); w1: [25,256] bf16;
       w2, w3: [256,256] bf16; b1,b2,b3,gamma,beta: [1,256] f32."""
    M, K = x_flat.shape
    H1 = w1.shape[1]
    assert M % tm == 0

    return pl.pallas_call(
        _object_encoder_kernel,
        out_shape=jax.ShapeDtypeStruct((M, H1), jnp.float32),
        grid_spec=pltpu.PrefetchScalarGridSpec(
            num_scalar_prefetch=0,
            grid=(M // tm,),
            in_specs=[
                pl.BlockSpec((tm, K), lambda i: (i, 0)),    # x tile (moves)
                pl.BlockSpec((K, H1), lambda i: (0, 0)),    # W1 (resident)
                pl.BlockSpec((1, H1), lambda i: (0, 0)),    # b1
                pl.BlockSpec((H1, H1), lambda i: (0, 0)),   # W2
                pl.BlockSpec((1, H1), lambda i: (0, 0)),    # b2
                pl.BlockSpec((1, H1), lambda i: (0, 0)),    # gamma
                pl.BlockSpec((1, H1), lambda i: (0, 0)),    # beta
                pl.BlockSpec((H1, H1), lambda i: (0, 0)),   # W3
                pl.BlockSpec((1, H1), lambda i: (0, 0)),    # b3
            ],
            out_specs=pl.BlockSpec((tm, H1), lambda i: (i, 0)),
        ),
        compiler_params=pltpu.CompilerParams(
            dimension_semantics=("parallel",)),             # shard M across TCs
    )(x_flat, w1, b1, w2, b2, gamma, beta, w3, b3)


# ---------------------------------------------------------------------------
# Wrapper: flatten rows, pad M to a tile multiple, cast matmul operands to
# bf16, run the kernel, slice/reshape back to [B, N, 256] (f32).
# Weights are given in torch layout ([out, in]) and transposed here.
# ---------------------------------------------------------------------------
def object_encoder_forward(x, w1_oi, b1, w2_oi, b2, gamma, beta, w3_oi, b3,
                           *, tm=512):
    B, N, H, W = x.shape
    M = B * N
    K = H * W                                  # 25

    x_flat = x.reshape(M, K)                   # contiguous reshape, no HBM copy
    tm = min(tm, _round_up(M, 8))              # clamp tile to padded problem
    M_pad = _round_up(M, tm)
    if M_pad != M:
        x_flat = jnp.pad(x_flat, ((0, M_pad - M), (0, 0)))

    out = object_encoder_pallas(
        x_flat.astype(jnp.bfloat16),
        w1_oi.T.astype(jnp.bfloat16), b1.reshape(1, -1).astype(jnp.float32),
        w2_oi.T.astype(jnp.bfloat16), b2.reshape(1, -1).astype(jnp.float32),
        gamma.reshape(1, -1).astype(jnp.float32),
        beta.reshape(1, -1).astype(jnp.float32),
        w3_oi.T.astype(jnp.bfloat16), b3.reshape(1, -1).astype(jnp.float32),
        tm=tm)                                 # [M_pad, 256]

    return out[:M].reshape(B, N, -1)


# ---------------------------------------------------------------------------
# Pure-JAX f32 reference (mirrors the torch forward exactly).
# ---------------------------------------------------------------------------
def reference_forward(x, w1_oi, b1, w2_oi, b2, gamma, beta, w3_oi, b3):
    B, N, H, W = x.shape
    h = x.reshape(B, N, H * W)
    h = jax.nn.sigmoid(h @ w1_oi.T + b1)
    h = jax.nn.sigmoid(h @ w2_oi.T + b2)
    mean = jnp.mean(h, axis=-1, keepdims=True)
    var = jnp.mean((h - mean) ** 2, axis=-1, keepdims=True)
    h = (h - mean) / jnp.sqrt(var + _LN_EPS) * gamma + beta
    return h @ w3_oi.T + b3


if __name__ == "__main__":
    key = jax.random.PRNGKey(0)
    ks = jax.random.split(key, 10)

    # Small shapes consistent with the module: l1 = Linear(5*5, 256).
    B, N, H, W = 2, 8, 5, 5
    x = jax.random.normal(ks[0], (B, N, H, W), dtype=jnp.float32)

    # Synthetic parameters in torch layout ([out_features, in_features]).
    w1 = jax.random.normal(ks[1], (256, 25), dtype=jnp.float32) * 0.2
    b1 = jax.random.normal(ks[2], (256,), dtype=jnp.float32) * 0.1
    w2 = jax.random.normal(ks[3], (256, 256), dtype=jnp.float32) * 0.05
    b2 = jax.random.normal(ks[4], (256,), dtype=jnp.float32) * 0.1
    gamma = 1.0 + jax.random.normal(ks[5], (256,), dtype=jnp.float32) * 0.1
    beta = jax.random.normal(ks[6], (256,), dtype=jnp.float32) * 0.1
    w3 = jax.random.normal(ks[7], (256, 256), dtype=jnp.float32) * 0.05
    b3 = jax.random.normal(ks[8], (256,), dtype=jnp.float32) * 0.1

    # tm=8 here so the tiny example exercises a multi-step grid (M=16 -> 2 tiles).
    out = object_encoder_forward(x, w1, b1, w2, b2, gamma, beta, w3, b3, tm=8)
    out = jax.block_until_ready(out)

    ref = jax.block_until_ready(
        reference_forward(x, w1, b1, w2, b2, gamma, beta, w3, b3))

    assert out.shape == (B, N, 256), out.shape
    err = float(jnp.max(jnp.abs(out - ref)))
    scale = float(jnp.max(jnp.abs(ref))) + 1e-6
    # bf16 matmul operands with f32 accumulation: allow ~a few % relative error.
    assert err / scale < 5e-2, (err, scale)

    print("KERNEL_OK")
</pallas_src>

<mosaic_0001>
module attributes {stable_mosaic.version = 11 : i64} {
  func.func @_object_encoder_kernel(%arg0: i32, %arg1: memref<8x25xbf16, #tpu.memory_space<vmem>>, %arg2: memref<25x256xbf16, #tpu.memory_space<vmem>>, %arg3: memref<1x256xf32, #tpu.memory_space<vmem>>, %arg4: memref<256x256xbf16, #tpu.memory_space<vmem>>, %arg5: memref<1x256xf32, #tpu.memory_space<vmem>>, %arg6: memref<1x256xf32, #tpu.memory_space<vmem>>, %arg7: memref<1x256xf32, #tpu.memory_space<vmem>>, %arg8: memref<256x256xbf16, #tpu.memory_space<vmem>>, %arg9: memref<1x256xf32, #tpu.memory_space<vmem>>, %arg10: memref<8x256xf32, #tpu.memory_space<vmem>>) attributes {dimension_semantics = [#tpu.dimension_semantics<parallel>], iteration_bounds = array<i64: 2>, scalar_prefetch = 0 : i64, scratch_operands = 0 : i64, tpu.core_type = #tpu.core_type<tc>, window_params = [{transform_indices = @transform_0, window_bounds = array<i64: 8, 25>}, {pipeline_mode = #tpu.pipeline_mode<synchronous>, transform_indices = @transform_1, window_bounds = array<i64: 25, 256>}, {pipeline_mode = #tpu.pipeline_mode<synchronous>, transform_indices = @transform_2, window_bounds = array<i64: 1, 256>}, {pipeline_mode = #tpu.pipeline_mode<synchronous>, transform_indices = @transform_3, window_bounds = array<i64: 256, 256>}, {pipeline_mode = #tpu.pipeline_mode<synchronous>, transform_indices = @transform_4, window_bounds = array<i64: 1, 256>}, {pipeline_mode = #tpu.pipeline_mode<synchronous>, transform_indices = @transform_5, window_bounds = array<i64: 1, 256>}, {pipeline_mode = #tpu.pipeline_mode<synchronous>, transform_indices = @transform_6, window_bounds = array<i64: 1, 256>}, {pipeline_mode = #tpu.pipeline_mode<synchronous>, transform_indices = @transform_7, window_bounds = array<i64: 256, 256>}, {pipeline_mode = #tpu.pipeline_mode<synchronous>, transform_indices = @transform_8, window_bounds = array<i64: 1, 256>}, {transform_indices = @transform_9, window_bounds = array<i64: 8, 256>}]} {
    %c0 = arith.constant 0 : index
    %c0_0 = arith.constant 0 : index
    %0 = vector.load %arg1[%c0, %c0_0] : memref<8x25xbf16, #tpu.memory_space<vmem>>, vector<8x25xbf16>
    %c0_1 = arith.constant 0 : index
    %c0_2 = arith.constant 0 : index
    %1 = vector.load %arg2[%c0_1, %c0_2] : memref<25x256xbf16, #tpu.memory_space<vmem>>, vector<25x256xbf16>
    %cst = arith.constant dense<0.000000e+00> : vector<8x256xf32>
    %2 = tpu.matmul %0, %1, %cst {dimension_numbers = #tpu.dot_dimension_numbers<[1], [0], [0], [1], [0, 0, 1, 1], [], []>} : vector<8x25xbf16>, vector<25x256xbf16>, vector<8x256xf32> -> vector<8x256xf32>
    %c0_3 = arith.constant 0 : index
    %c0_4 = arith.constant 0 : index
    %3 = vector.load %arg3[%c0_3, %c0_4] : memref<1x256xf32, #tpu.memory_space<vmem>>, vector<1x256xf32>
    %4 = vector.broadcast %3 : vector<1x256xf32> to vector<8x256xf32>
    %5 = arith.addf %2, %4 : vector<8x256xf32>
    %6 = arith.negf %5 : vector<8x256xf32>
    %7 = math.exp %6 : vector<8x256xf32>
    %cst_5 = arith.constant 1.000000e+00 : f32
    %8 = vector.broadcast %cst_5 : f32 to vector<8x256xf32>
    %9 = arith.addf %8, %7 : vector<8x256xf32>
    %10 = arith.divf %8, %9 : vector<8x256xf32>
    %11 = arith.truncf %10 : vector<8x256xf32> to vector<8x256xbf16>
    %c0_6 = arith.constant 0 : index
    %c0_7 = arith.constant 0 : index
    %12 = vector.load %arg4[%c0_6, %c0_7] : memref<256x256xbf16, #tpu.memory_space<vmem>>, vector<256x256xbf16>
    %cst_8 = arith.constant dense<0.000000e+00> : vector<8x256xf32>
    %13 = tpu.matmul %11, %12, %cst_8 {dimension_numbers = #tpu.dot_dimension_numbers<[1], [0], [0], [1], [0, 0, 1, 1], [], []>} : vector<8x256xbf16>, vector<256x256xbf16>, vector<8x256xf32> -> vector<8x256xf32>
    %c0_9 = arith.constant 0 : index
    %c0_10 = arith.constant 0 : index
    %14 = vector.load %arg5[%c0_9, %c0_10] : memref<1x256xf32, #tpu.memory_space<vmem>>, vector<1x256xf32>
    %15 = vector.broadcast %14 : vector<1x256xf32> to vector<8x256xf32>
    %16 = arith.addf %13, %15 : vector<8x256xf32>
    %17 = arith.negf %16 : vector<8x256xf32>
    %18 = math.exp %17 : vector<8x256xf32>
    %cst_11 = arith.constant 1.000000e+00 : f32
    %19 = vector.broadcast %cst_11 : f32 to vector<8x256xf32>
    %20 = arith.addf %19, %18 : vector<8x256xf32>
    %21 = arith.divf %19, %20 : vector<8x256xf32>
    %cst_12 = arith.constant dense<0.000000e+00> : vector<8xf32>
    %22 = vector.multi_reduction <add>, %21, %cst_12 [1] : vector<8x256xf32> to vector<8xf32>
    %23 = vector.shape_cast %22 : vector<8xf32> to vector<8x1xf32>
    %cst_13 = arith.constant 2.560000e+02 : f32
    %24 = vector.broadcast %cst_13 : f32 to vector<8x1xf32>
    %25 = arith.divf %23, %24 : vector<8x1xf32>
    %26 = vector.broadcast %25 : vector<8x1xf32> to vector<8x256xf32>
    %27 = arith.subf %21, %26 : vector<8x256xf32>
    %28 = arith.mulf %27, %27 : vector<8x256xf32>
    %cst_14 = arith.constant dense<0.000000e+00> : vector<8xf32>
    %29 = vector.multi_reduction <add>, %28, %cst_14 [1] : vector<8x256xf32> to vector<8xf32>
    %30 = vector.shape_cast %29 : vector<8xf32> to vector<8x1xf32>
    %cst_15 = arith.constant 2.560000e+02 : f32
    %31 = vector.broadcast %cst_15 : f32 to vector<8x1xf32>
    %32 = arith.divf %30, %31 : vector<8x1xf32>
    %cst_16 = arith.constant 9.99999974E-6 : f32
    %33 = vector.broadcast %cst_16 : f32 to vector<8x1xf32>
    %34 = arith.addf %32, %33 : vector<8x1xf32>
    %35 = math.rsqrt %34 : vector<8x1xf32>
    %36 = vector.broadcast %35 : vector<8x1xf32> to vector<8x256xf32>
    %37 = arith.mulf %27, %36 : vector<8x256xf32>
    %c0_17 = arith.constant 0 : index
    %c0_18 = arith.constant 0 : index
    %38 = vector.load %arg6[%c0_17, %c0_18] : memref<1x256xf32, #tpu.memory_space<vmem>>, vector<1x256xf32>
    %39 = vector.broadcast %38 : vector<1x256xf32> to vector<8x256xf32>
    %40 = arith.mulf %37, %39 : vector<8x256xf32>
    %c0_19 = arith.constant 0 : index
    %c0_20 = arith.constant 0 : index
    %41 = vector.load %arg7[%c0_19, %c0_20] : memref<1x256xf32, #tpu.memory_space<vmem>>, vector<1x256xf32>
    %42 = vector.broadcast %41 : vector<1x256xf32> to vector<8x256xf32>
    %43 = arith.addf %40, %42 : vector<8x256xf32>
    %44 = arith.truncf %43 : vector<8x256xf32> to vector<8x256xbf16>
    %c0_21 = arith.constant 0 : index
    %c0_22 = arith.constant 0 : index
    %45 = vector.load %arg8[%c0_21, %c0_22] : memref<256x256xbf16, #tpu.memory_space<vmem>>, vector<256x256xbf16>
    %cst_23 = arith.constant dense<0.000000e+00> : vector<8x256xf32>
    %46 = tpu.matmul %44, %45, %cst_23 {dimension_numbers = #tpu.dot_dimension_numbers<[1], [0], [0], [1], [0, 0, 1, 1], [], []>} : vector<8x256xbf16>, vector<256x256xbf16>, vector<8x256xf32> -> vector<8x256xf32>
    %c0_24 = arith.constant 0 : index
    %c0_25 = arith.constant 0 : index
    %47 = vector.load %arg9[%c0_24, %c0_25] : memref<1x256xf32, #tpu.memory_space<vmem>>, vector<1x256xf32>
    %48 = vector.broadcast %47 : vector<1x256xf32> to vector<8x256xf32>
    %49 = arith.addf %46, %48 : vector<8x256xf32>
    %c0_26 = arith.constant 0 : index
    %c0_27 = arith.constant 0 : index
    %50 = vector.load %arg10[%c0_26, %c0_27] : memref<8x256xf32, #tpu.memory_space<vmem>>, vector<8x256xf32>
    tpu.vector_store %arg10[%c0_26, %c0_27], %49 {strides = array<i32>} : memref<8x256xf32, #tpu.memory_space<vmem>>, vector<8x256xf32>,
    return
  }
  func.func @transform_0(%arg0: i32) -> (i32, i32) {
    %c0_i32 = arith.constant 0 : i32
    %c0_i32_0 = arith.constant 0 : i32
    return %arg0, %c0_i32 : i32, i32
  }
  func.func @transform_1(%arg0: i32) -> (i32, i32) {
    %c0_i32 = arith.constant 0 : i32
    %c0_i32_0 = arith.constant 0 : i32
    %c0_i32_1 = arith.constant 0 : i32
    return %c0_i32, %c0_i32_0 : i32, i32
  }
  func.func @transform_2(%arg0: i32) -> (i32, i32) {
    %c0_i32 = arith.constant 0 : i32
    %c0_i32_0 = arith.constant 0 : i32
    %c0_i32_1 = arith.constant 0 : i32
    return %c0_i32, %c0_i32_0 : i32, i32
  }
  func.func @transform_3(%arg0: i32) -> (i32, i32) {
    %c0_i32 = arith.constant 0 : i32
    %c0_i32_0 = arith.constant 0 : i32
    %c0_i32_1 = arith.constant 0 : i32
    return %c0_i32, %c0_i32_0 : i32, i32
  }
  func.func @transform_4(%arg0: i32) -> (i32, i32) {
    %c0_i32 = arith.constant 0 : i32
    %c0_i32_0 = arith.constant 0 : i32
    %c0_i32_1 = arith.constant 0 : i32
    return %c0_i32, %c0_i32_0 : i32, i32
  }
  func.func @transform_5(%arg0: i32) -> (i32, i32) {
    %c0_i32 = arith.constant 0 : i32
    %c0_i32_0 = arith.constant 0 : i32
    %c0_i32_1 = arith.constant 0 : i32
    return %c0_i32, %c0_i32_0 : i32, i32
  }
  func.func @transform_6(%arg0: i32) -> (i32, i32) {
    %c0_i32 = arith.constant 0 : i32
    %c0_i32_0 = arith.constant 0 : i32
    %c0_i32_1 = arith.constant 0 : i32
    return %c0_i32, %c0_i32_0 : i32, i32
  }
  func.func @transform_7(%arg0: i32) -> (i32, i32) {
    %c0_i32 = arith.constant 0 : i32
    %c0_i32_0 = arith.constant 0 : i32
    %c0_i32_1 = arith.constant 0 : i32
    return %c0_i32, %c0_i32_0 : i32, i32
  }
  func.func @transform_8(%arg0: i32) -> (i32, i32) {
    %c0_i32 = arith.constant 0 : i32
    %c0_i32_0 = arith.constant 0 : i32
    %c0_i32_1 = arith.constant 0 : i32
    return %c0_i32, %c0_i32_0 : i32, i32
  }
  func.func @transform_9(%arg0: i32) -> (i32, i32) {
    %c0_i32 = arith.constant 0 : i32
    %c0_i32_0 = arith.constant 0 : i32
    return %arg0, %c0_i32 : i32, i32
  }
}

</mosaic_0001>

<llo_original>
// kernel: tpu_custom_call.1
$region0: #{tpu_custom_call.1}
  #allocation0 [shape = 'u32[]', space=smem, size = 0x4, offset = 0x4, fixed_abs, tag = 'smem constant byte address 0x4 - core index']
  #allocation1 [shape = 'u32[72,128]{1,0:T(1,128)}', space=vmem, size = 0x9000, scoped, tag = 'internal scratch']
  %s0 = inlined_call_operand.hbm [shape: bf16[16,25], index: 0, kind: input, shape index: {}]
  %s1 = inlined_call_operand.hbm [shape: bf16[25,256], index: 1, kind: input, shape index: {}]
  %s2 = inlined_call_operand.hbm [shape: f32[1,256], index: 2, kind: input, shape index: {}]
  %s3 = inlined_call_operand.hbm [shape: bf16[256,256], index: 3, kind: input, shape index: {}]
  %s4 = inlined_call_operand.vmem [shape: f32[1,256], index: 4, kind: input, shape index: {}]
  %s5 = inlined_call_operand.vmem [shape: f32[1,256], index: 5, kind: input, shape index: {}]
  %s6 = inlined_call_operand.hbm [shape: f32[1,256], index: 6, kind: input, shape index: {}]
  %s7 = inlined_call_operand.hbm [shape: bf16[256,256], index: 7, kind: input, shape index: {}]
  %s8 = inlined_call_operand.vmem [shape: f32[1,256], index: 8, kind: input, shape index: {}]
  %s9 = inlined_call_operand.hbm [shape: f32[16,256], index: 9, kind: output, shape index: {}]
  %s10 = sld [smem:[#allocation0]]
  $region93: #{tpu_custom_call.1} parent=0
    _
  %s12 = ssub.s32 1, %s10
  %s13 = scalar_select 0, %s12, %s10
  $region1: #{tpu_custom_call.1} parent=0
    #allocation2 [shape = 'u8[4096]{0}', space=vmem, size = 0x1000, scoped, tag = 'input window, operand 0']
    #allocation3 [shape = 's32[2]{0}', space=sflag, size = 0x8, scoped, tag = 'scoped memory for tpu_custom_call.1']
    #allocation4 [shape = 's32[2]{0}', space=sflag, size = 0x8, scoped, tag = 'scoped memory for tpu_custom_call.1']
    #allocation5 [shape = 'u8[16384]{0}', space=vmem, size = 0x4000, scoped, tag = 'input window, operand 1, single buffered']
    #allocation6 [shape = 's32[1]{0}', space=sflag, size = 0x4, scoped, tag = 'scoped memory for tpu_custom_call.1']
    #allocation7 [shape = 'u8[1024]{0}', space=vmem, size = 0x400, scoped, tag = 'input window, operand 2, single buffered']
    #allocation8 [shape = 'u8[131072]{0}', space=vmem, size = 0x20000, scoped, tag = 'input window, operand 3, single buffered']
    #allocation9 [shape = 's32[1]{0}', space=sflag, size = 0x4, scoped, tag = 'scoped memory for tpu_custom_call.1']
    #allocation10 [shape = 'u8[1024]{0}', space=vmem, size = 0x400, scoped, tag = 'input window, operand 6, single buffered']
    #allocation11 [shape = 'u8[131072]{0}', space=vmem, size = 0x20000, scoped, tag = 'input window, operand 7, single buffered']
    #allocation12 [shape = 's32[1]{0}', space=sflag, size = 0x4, scoped, tag = 'scoped memory for tpu_custom_call.1']
    #allocation13 [shape = 'u8[16384]{0}', space=vmem, size = 0x4000, scoped, tag = 'output window, operand 0']
    %14 = vsyncpa [#allocation3], 0
    %s15 = scalar_lea.sflag [#allocation3], 1
    %16 = vsyncpa %s15, 0
    %17 = vsyncpa [#allocation6], 0
    %18 = vsyncpa [#allocation9], 0
    %19 = vsyncpa [#allocation12], 0
    %20 = vsyncpa [#allocation4], 0
    %s21 = scalar_lea.sflag [#allocation4], 1
    %22 = vsyncpa %s21, 0
    loop: start=0, step=1, limit=4
    $region2: #{tpu_custom_call.1} parent=1 // loop_pre_header
      _
    $region3: #{tpu_custom_call.1} parent=1 // loop_header
      %s24 = sphi 0, %s28
      %p25 = scmp.ge.s32.totalorder %s24, 4
      %s34 = sphi 0, %s36
      %s37 = sphi 0, %s34
      %s38 = sphi 0, %s37
      %s54 = sphi 0, %s38
      %s58 = sphi 0, %s58
      %s60 = sphi 0, %s58
      %s61 = sphi 0, %s60
      %s75 = sphi 0, %s61
      %s79 = sphi 0, %s79
      %s81 = sphi 0, %s79
      %s82 = sphi 0, %s81
      %s96 = sphi 0, %s82
      %s100 = sphi 0, %s100
      %s102 = sphi 0, %s100
      %s103 = sphi 0, %s102
      %s117 = sphi 0, %s103
      %s121 = sphi 0, %s121
      %s123 = sphi 0, %s121
      %s124 = sphi 0, %s123
      %s138 = sphi 0, %s124
      %s142 = sphi 0, %s142
      %s144 = sphi 0, %s142
      %s145 = sphi 0, %s144
      %s159 = sphi 0, %s145
      %s163 = sphi 0, %s163
      %s165 = sphi 0, %s163
      %s166 = sphi 0, %s165
      %s180 = sphi 0, %s166
      %s184 = sphi 0, %s184
      %s186 = sphi 0, %s184
      %s187 = sphi 0, %s186
      %s201 = sphi 0, %s187
      %s205 = sphi 0, %s205
      %s207 = sphi 0, %s205
      %s208 = sphi 0, %s207
      %s222 = sphi 0, %s208
      %s228 = sphi 0, %s230
      %s231 = sphi 0, %s228
      %s232 = sphi 0, %s231
      %s248 = sphi 0, %s232
    $region4: #{tpu_custom_call.1} parent=1 // loop_header_branch
      %27 = sbr.rel (%p25) target = $region8
    $region5: #{tpu_custom_call.1} parent=1 // loop_body
      %s29 = ssub.s32 %s24, 1
      %s30 = ssub.s32 %s24, 2
      %s31 = sadd.s32 %s24, 1
      %s32 = ssub.s32 %s24, %s31
      %p33 = scmp.eq.s32.totalorder %s32, 0
      %s35 = sadd.s32 %s34, 1
      %s36 = scalar_select %p33, %s34, %s35
      %p39 = pneg %p33
      %p40 = scmp.eq.s32.totalorder %s24, 1
      %p41 = por %p39, %p40
      %p42 = scmp.ne.s32.totalorder %s34, %s37
      %p43 = scmp.eq.s32.totalorder %s24, 0
      %p44 = por %p42, %p43
      %p45 = scmp.ne.s32.totalorder %s34, %s37
      %p46 = scmp.eq.s32.totalorder %s29, 1
      %p47 = por %p45, %p46
      %p48 = scmp.ne.s32.totalorder %s37, %s38
      %p49 = scmp.eq.s32.totalorder %s29, 0
      %p50 = por %p48, %p49
      %p51 = scmp.ne.s32.totalorder %s37, %s38
      %p52 = scmp.eq.s32.totalorder %s30, 1
      %p53 = por %p51, %p52
      %p55 = scmp.ne.s32.totalorder %s38, %s54
      %p56 = scmp.eq.s32.totalorder %s30, 0
      %p57 = por %p55, %p56
      %s59 = sadd.s32 %s58, 1
      %p62 = scmp.eq.s32.totalorder %s24, 1
      %p63 = scmp.ne.s32.totalorder %s58, %s60
      %p64 = scmp.eq.s32.totalorder %s24, 0
      %p65 = por %p63, %p64
      %p66 = scmp.ne.s32.totalorder %s58, %s60
      %p67 = scmp.eq.s32.totalorder %s29, 1
      %p68 = por %p66, %p67
      %p69 = scmp.ne.s32.totalorder %s60, %s61
      %p70 = scmp.eq.s32.totalorder %s29, 0
      %p71 = por %p69, %p70
      %p72 = scmp.ne.s32.totalorder %s60, %s61
      %p73 = scmp.eq.s32.totalorder %s30, 1
      %p74 = por %p72, %p73
      %p76 = scmp.ne.s32.totalorder %s61, %s75
      %p77 = scmp.eq.s32.totalorder %s30, 0
      %p78 = por %p76, %p77
      %s80 = sadd.s32 %s79, 1
      %p83 = scmp.eq.s32.totalorder %s24, 1
      %p84 = scmp.ne.s32.totalorder %s79, %s81
      %p85 = scmp.eq.s32.totalorder %s24, 0
      %p86 = por %p84, %p85
      %p87 = scmp.ne.s32.totalorder %s79, %s81
      %p88 = scmp.eq.s32.totalorder %s29, 1
      %p89 = por %p87, %p88
      %p90 = scmp.ne.s32.totalorder %s81, %s82
      %p91 = scmp.eq.s32.totalorder %s29, 0
      %p92 = por %p90, %p91
      %p93 = scmp.ne.s32.totalorder %s81, %s82
      %p94 = scmp.eq.s32.totalorder %s30, 1
      %p95 = por %p93, %p94
      %p97 = scmp.ne.s32.totalorder %s82, %s96
      %p98 = scmp.eq.s32.totalorder %s30, 0
      %p99 = por %p97, %p98
      %s101 = sadd.s32 %s100, 1
      %p104 = scmp.eq.s32.totalorder %s24, 1
      %p105 = scmp.ne.s32.totalorder %s100, %s102
      %p106 = scmp.eq.s32.totalorder %s24, 0
      %p107 = por %p105, %p106
      %p108 = scmp.ne.s32.totalorder %s100, %s102
      %p109 = scmp.eq.s32.totalorder %s29, 1
      %p110 = por %p108, %p109
      %p111 = scmp.ne.s32.totalorder %s102, %s103
      %p112 = scmp.eq.s32.totalorder %s29, 0
      %p113 = por %p111, %p112
      %p114 = scmp.ne.s32.totalorder %s102, %s103
      %p115 = scmp.eq.s32.totalorder %s30, 1
      %p116 = por %p114, %p115
      %p118 = scmp.ne.s32.totalorder %s103, %s117
      %p119 = scmp.eq.s32.totalorder %s30, 0
      %p120 = por %p118, %p119
      %s122 = sadd.s32 %s121, 1
      %p125 = scmp.eq.s32.totalorder %s24, 1
      %p126 = scmp.ne.s32.totalorder %s121, %s123
      %p127 = scmp.eq.s32.totalorder %s24, 0
      %p128 = por %p126, %p127
      %p129 = scmp.ne.s32.totalorder %s121, %s123
      %p130 = scmp.eq.s32.totalorder %s29, 1
      %p131 = por %p129, %p130
      %p132 = scmp.ne.s32.totalorder %s123, %s124
      %p133 = scmp.eq.s32.totalorder %s29, 0
      %p134 = por %p132, %p133
      %p135 = scmp.ne.s32.totalorder %s123, %s124
      %p136 = scmp.eq.s32.totalorder %s30, 1
      %p137 = por %p135, %p136
      %p139 = scmp.ne.s32.totalorder %s124, %s138
      %p140 = scmp.eq.s32.totalorder %s30, 0
      %p141 = por %p139, %p140
      %s143 = sadd.s32 %s142, 1
      %p146 = scmp.eq.s32.totalorder %s24, 1
      %p147 = scmp.ne.s32.totalorder %s142, %s144
      %p148 = scmp.eq.s32.totalorder %s24, 0
      %p149 = por %p147, %p148
      %p150 = scmp.ne.s32.totalorder %s142, %s144
      %p151 = scmp.eq.s32.totalorder %s29, 1
      %p152 = por %p150, %p151
      %p153 = scmp.ne.s32.totalorder %s144, %s145
      %p154 = scmp.eq.s32.totalorder %s29, 0
      %p155 = por %p153, %p154
      %p156 = scmp.ne.s32.totalorder %s144, %s145
      %p157 = scmp.eq.s32.totalorder %s30, 1
      %p158 = por %p156, %p157
      %p160 = scmp.ne.s32.totalorder %s145, %s159
      %p161 = scmp.eq.s32.totalorder %s30, 0
      %p162 = por %p160, %p161
      %s164 = sadd.s32 %s163, 1
      %p167 = scmp.eq.s32.totalorder %s24, 1
      %p168 = scmp.ne.s32.totalorder %s163, %s165
      %p169 = scmp.eq.s32.totalorder %s24, 0
      %p170 = por %p168, %p169
      %p171 = scmp.ne.s32.totalorder %s163, %s165
      %p172 = scmp.eq.s32.totalorder %s29, 1
      %p173 = por %p171, %p172
      %p174 = scmp.ne.s32.totalorder %s165, %s166
      %p175 = scmp.eq.s32.totalorder %s29, 0
      %p176 = por %p174, %p175
      %p177 = scmp.ne.s32.totalorder %s165, %s166
      %p178 = scmp.eq.s32.totalorder %s30, 1
      %p179 = por %p177, %p178
      %p181 = scmp.ne.s32.totalorder %s166, %s180
      %p182 = scmp.eq.s32.totalorder %s30, 0
      %p183 = por %p181, %p182
      %s185 = sadd.s32 %s184, 1
      %p188 = scmp.eq.s32.totalorder %s24, 1
      %p189 = scmp.ne.s32.totalorder %s184, %s186
      %p190 = scmp.eq.s32.totalorder %s24, 0
      %p191 = por %p189, %p190
      %p192 = scmp.ne.s32.totalorder %s184, %s186
      %p193 = scmp.eq.s32.totalorder %s29, 1
      %p194 = por %p192, %p193
      %p195 = scmp.ne.s32.totalorder %s186, %s187
      %p196 = scmp.eq.s32.totalorder %s29, 0
      %p197 = por %p195, %p196
      %p198 = scmp.ne.s32.totalorder %s186, %s187
      %p199 = scmp.eq.s32.totalorder %s30, 1
      %p200 = por %p198, %p199
      %p202 = scmp.ne.s32.totalorder %s187, %s201
      %p203 = scmp.eq.s32.totalorder %s30, 0
      %p204 = por %p202, %p203
      %s206 = sadd.s32 %s205, 1
      %p209 = scmp.eq.s32.totalorder %s24, 1
      %p210 = scmp.ne.s32.totalorder %s205, %s207
      %p211 = scmp.eq.s32.totalorder %s24, 0
      %p212 = por %p210, %p211
      %p213 = scmp.ne.s32.totalorder %s205, %s207
      %p214 = scmp.eq.s32.totalorder %s29, 1
      %p215 = por %p213, %p214
      %p216 = scmp.ne.s32.totalorder %s207, %s208
      %p217 = scmp.eq.s32.totalorder %s29, 0
      %p218 = por %p216, %p217
      %p219 = scmp.ne.s32.totalorder %s207, %s208
      %p220 = scmp.eq.s32.totalorder %s30, 1
      %p221 = por %p219, %p220
      %p223 = scmp.ne.s32.totalorder %s208, %s222
      %p224 = scmp.eq.s32.totalorder %s30, 0
      %p225 = por %p223, %p224
      %s226 = ssub.s32 %s24, %s31
      %p227 = scmp.eq.s32.totalorder %s226, 0
      %s229 = sadd.s32 %s228, 1
      %s230 = scalar_select %p227, %s228, %s229
      %p233 = pneg %p227
      %p234 = scmp.eq.s32.totalorder %s24, 1
      %p235 = por %p233, %p234
      %p236 = scmp.ne.s32.totalorder %s228, %s231
      %p237 = scmp.eq.s32.totalorder %s24, 0
      %p238 = por %p236, %p237
      %p239 = scmp.ne.s32.totalorder %s228, %s231
      %p240 = scmp.eq.s32.totalorder %s29, 1
      %p241 = por %p239, %p240
      %p242 = scmp.ne.s32.totalorder %s231, %s232
      %p243 = scmp.eq.s32.totalorder %s29, 0
      %p244 = por %p242, %p243
      %p245 = scmp.ne.s32.totalorder %s231, %s232
      %p246 = scmp.eq.s32.totalorder %s30, 1
      %p247 = por %p245, %p246
      %p249 = scmp.ne.s32.totalorder %s232, %s248
      %p250 = scmp.eq.s32.totalorder %s30, 0
      %p251 = por %p249, %p250
      %p252 = scmp.le.s32.totalorder 1, %s24
      %p253 = scmp.lt.s32.totalorder %s24, 3
      %p254 = pnand %p252, %p253
      %p255 = pneg %p254
      // Predicated region
      $region9: #{tpu_custom_call.1} parent=5 // pred_check
        _
      $region10: #{tpu_custom_call.1} parent=5 // pred_check_branch
        %257 = sbr.rel (%p254) target = $region12
      $region11: #{tpu_custom_call.1} parent=5 // pred_region
        %s258 = ssub.s32 %s24, 1
        // Predicated region
        $region13: #{tpu_custom_call.1} parent=11 // pred_check
          %p259 = pneg %p71
        $region14: #{tpu_custom_call.1} parent=11 // pred_check_branch
          %261 = sbr.rel (%p259) target = $region16
        $region15: #{tpu_custom_call.1} parent=11 // pred_region
          %263 = vsyncadd [#allocation6], 0
          %s264 = sshll.u32 %s1, 4
          %s265 = int_to_ptr.hbm [resolvable:$true] %s264
          %s266 = sshll.u32 [#allocation5], 4
          %s267 = int_to_ptr.vmem [resolvable:$true] %s266
          %272 = dma.hbm_to_vmem [thread:$0]  %s265, 512, %s267, [#allocation6], 128, 128, 8
        $region16: #{tpu_custom_call.1} parent=11 // pred_fallthru
          _
        // Predicated region
        $region17: #{tpu_custom_call.1} parent=11 // pred_check
          %p273 = pneg %p92
        $region18: #{tpu_custom_call.1} parent=11 // pred_check_branch
          %275 = sbr.rel (%p273) target = $region20
        $region19: #{tpu_custom_call.1} parent=11 // pred_region
          %277 = vsyncadd [#allocation6], 0
          %s279 = sshll.u32 %s2, 4
          %s280 = int_to_ptr.hbm [resolvable:$true] %s279
          %s281 = sshll.u32 [#allocation7], 4
          %s282 = int_to_ptr.vmem [resolvable:$true] %s281
          %284 = dma.hbm_to_vmem [thread:$0]  %s280, 32, %s282, [#allocation6]
        $region20: #{tpu_custom_call.1} parent=11 // pred_fallthru
          _
        // Predicated region
        $region21: #{tpu_custom_call.1} parent=11 // pred_check
          %p285 = pneg %p113
        $region22: #{tpu_custom_call.1} parent=11 // pred_check_branch
          %287 = sbr.rel (%p285) target = $region24
        $region23: #{tpu_custom_call.1} parent=11 // pred_region
          %289 = vsyncadd [#allocation9], 0
          %s290 = sshll.u32 %s3, 4
          %s291 = int_to_ptr.hbm [resolvable:$true] %s290
          %s292 = sshll.u32 [#allocation8], 4
          %s293 = int_to_ptr.vmem [resolvable:$true] %s292
          %298 = dma.hbm_to_vmem [thread:$0]  %s291, 4096, %s293, [#allocation9], 128, 128, 8
        $region24: #{tpu_custom_call.1} parent=11 // pred_fallthru
          _
        // Predicated region
        $region25: #{tpu_custom_call.1} parent=11 // pred_check
          %p299 = pneg %p134
        $region26: #{tpu_custom_call.1} parent=11 // pred_check_branch
          %301 = sbr.rel (%p299) target = $region28
        $region27: #{tpu_custom_call.1} parent=11 // pred_region
          _
        $region28: #{tpu_custom_call.1} parent=11 // pred_fallthru
          _
        // Predicated region
        $region29: #{tpu_custom_call.1} parent=11 // pred_check
          %p302 = pneg %p155
        $region30: #{tpu_custom_call.1} parent=11 // pred_check_branch
          %304 = sbr.rel (%p302) target = $region32
        $region31: #{tpu_custom_call.1} parent=11 // pred_region
          _
        $region32: #{tpu_custom_call.1} parent=11 // pred_fallthru
          _
        // Predicated region
        $region33: #{tpu_custom_call.1} parent=11 // pred_check
          %p305 = pneg %p176
        $region34: #{tpu_custom_call.1} parent=11 // pred_check_branch
          %307 = sbr.rel (%p305) target = $region36
        $region35: #{tpu_custom_call.1} parent=11 // pred_region
          %309 = vsyncadd [#allocation9], 0
          %s311 = sshll.u32 %s6, 4
          %s312 = int_to_ptr.hbm [resolvable:$true] %s311
          %s313 = sshll.u32 [#allocation10], 4
          %s314 = int_to_ptr.vmem [resolvable:$true] %s313
          %316 = dma.hbm_to_vmem [thread:$0]  %s312, 32, %s314, [#allocation9]
        $region36: #{tpu_custom_call.1} parent=11 // pred_fallthru
          _
        // Predicated region
        $region37: #{tpu_custom_call.1} parent=11 // pred_check
          %p317 = pneg %p197
        $region38: #{tpu_custom_call.1} parent=11 // pred_check_branch
          %319 = sbr.rel (%p317) target = $region40
        $region39: #{tpu_custom_call.1} parent=11 // pred_region
          %321 = vsyncadd [#allocation12], 0
          %s322 = sshll.u32 %s7, 4
          %s323 = int_to_ptr.hbm [resolvable:$true] %s322
          %s324 = sshll.u32 [#allocation11], 4
          %s325 = int_to_ptr.vmem [resolvable:$true] %s324
          %330 = dma.hbm_to_vmem [thread:$0]  %s323, 4096, %s325, [#allocation12], 128, 128, 8
        $region40: #{tpu_custom_call.1} parent=11 // pred_fallthru
          _
        // Predicated region
        $region41: #{tpu_custom_call.1} parent=11 // pred_check
          %p331 = pneg %p218
        $region42: #{tpu_custom_call.1} parent=11 // pred_check_branch
          %333 = sbr.rel (%p331) target = $region44
        $region43: #{tpu_custom_call.1} parent=11 // pred_region
          _
        $region44: #{tpu_custom_call.1} parent=11 // pred_fallthru
          _
      $region12: #{tpu_custom_call.1} parent=5 // pred_fallthru
        _
      %p334 = scmp.lt.s32.totalorder %s24, 2
      // Predicated region
      $region45: #{tpu_custom_call.1} parent=5 // pred_check
        %p335 = pneg %p334
      $region46: #{tpu_custom_call.1} parent=5 // pred_check_branch
        %337 = sbr.rel (%p335) target = $region48
      $region47: #{tpu_custom_call.1} parent=5 // pred_region
        // Predicated region
        $region49: #{tpu_custom_call.1} parent=47 // pred_check
          %p338 = pneg %p44
        $region50: #{tpu_custom_call.1} parent=47 // pred_check_branch
          %340 = sbr.rel (%p338) target = $region52
        $region51: #{tpu_custom_call.1} parent=47 // pred_region
          %s341 = sand.u32 %s34, 1
          %s342 = scalar_lea.sflag [#allocation3], %s341
          %s343 = sand.u32 %s34, 1
          %s344 = smul.addr %s343, 4
          %s345 = scalar_lea.vmem [#allocation2], %s344
          %347 = vsyncadd %s342, 0
          %s348 = smul.addr %s24, 4
          %s349 = scalar_lea.hbm %s0, %s348
          %s351 = sshll.u32 %s349, 4
          %s352 = int_to_ptr.hbm [resolvable:$true] %s351
          %s353 = sshll.u32 %s345, 4
          %s354 = int_to_ptr.vmem [resolvable:$true] %s353
          %356 = dma.hbm_to_vmem [thread:$0]  %s352, 64, %s354, %s342
        $region52: #{tpu_custom_call.1} parent=47 // pred_fallthru
          _
      $region48: #{tpu_custom_call.1} parent=5 // pred_fallthru
        _
      %p357 = scmp.le.s32.totalorder 1, %s24
      %p358 = scmp.lt.s32.totalorder %s24, 3
      %p359 = pnand %p357, %p358
      %p360 = pneg %p359
      // Predicated region
      $region53: #{tpu_custom_call.1} parent=5 // pred_check
        _
      $region54: #{tpu_custom_call.1} parent=5 // pred_check_branch
        %362 = sbr.rel (%p359) target = $region56
      $region55: #{tpu_custom_call.1} parent=5 // pred_region
        %s363 = ssub.s32 %s24, 1
        %s364 = sand.u32 %s37, 1
        %s365 = scalar_lea.sflag [#allocation3], %s364
        %s366 = sand.u32 %s37, 1
        %s367 = smul.addr %s366, 4
        %s368 = scalar_lea.vmem [#allocation2], %s367
        // Predicated region
        $region57: #{tpu_custom_call.1} parent=55 // pred_check
          %p369 = pneg %p50
        $region58: #{tpu_custom_call.1} parent=55 // pred_check_branch
          %371 = sbr.rel (%p369) target = $region60
        $region59: #{tpu_custom_call.1} parent=55 // pred_region
          %373 = dma.done %s365, 64
        $region60: #{tpu_custom_call.1} parent=55 // pred_fallthru
          _
        // Predicated region
        $region61: #{tpu_custom_call.1} parent=55 // pred_check
          %p374 = pneg %p71
        $region62: #{tpu_custom_call.1} parent=55 // pred_check_branch
          %376 = sbr.rel (%p374) target = $region64
        $region63: #{tpu_custom_call.1} parent=55 // pred_region
          %378 = dma.done [#allocation6], 512
        $region64: #{tpu_custom_call.1} parent=55 // pred_fallthru
          _
        // Predicated region
        $region65: #{tpu_custom_call.1} parent=55 // pred_check
          %p379 = pneg %p92
        $region66: #{tpu_custom_call.1} parent=55 // pred_check_branch
          %381 = sbr.rel (%p379) target = $region68
        $region67: #{tpu_custom_call.1} parent=55 // pred_region
          %383 = dma.done [#allocation6], 32
        $region68: #{tpu_custom_call.1} parent=55 // pred_fallthru
          _
        // Predicated region
        $region69: #{tpu_custom_call.1} parent=55 // pred_check
          %p384 = pneg %p113
        $region70: #{tpu_custom_call.1} parent=55 // pred_check_branch
          %386 = sbr.rel (%p384) target = $region72
        $region71: #{tpu_custom_call.1} parent=55 // pred_region
          %388 = dma.done [#allocation9], 4096
        $region72: #{tpu_custom_call.1} parent=55 // pred_fallthru
          _
        // Predicated region
        $region73: #{tpu_custom_call.1} parent=55 // pred_check
          %p389 = pneg %p176
        $region74: #{tpu_custom_call.1} parent=55 // pred_check_branch
          %391 = sbr.rel (%p389) target = $region76
        $region75: #{tpu_custom_call.1} parent=55 // pred_region
          %393 = dma.done [#allocation9], 32
        $region76: #{tpu_custom_call.1} parent=55 // pred_fallthru
          _
        // Predicated region
        $region77: #{tpu_custom_call.1} parent=55 // pred_check
          %p394 = pneg %p197
        $region78: #{tpu_custom_call.1} parent=55 // pred_check_branch
          %396 = sbr.rel (%p394) target = $region80
        $region79: #{tpu_custom_call.1} parent=55 // pred_region
          %398 = dma.done [#allocation12], 4096
        $region80: #{tpu_custom_call.1} parent=55 // pred_fallthru
          _
        %s399 = sand.u32 %s37, 1
        %s400 = scalar_lea.sflag [#allocation3], %s399
        %s401 = sand.u32 %s37, 1
        %s402 = smul.addr %s401, 4
        %s403 = scalar_lea.vmem [#allocation2], %s402
        %p404 = pneg %p50
        %p405 = pneg %p47
        %p406 = pneg %p71
        %p407 = pneg %p68
        %p408 = pneg %p92
        %p409 = pneg %p89
        %p410 = pneg %p113
        %p411 = pneg %p110
        %p412 = pneg %p134
        %p413 = pneg %p131
        %p414 = pneg %p155
        %p415 = pneg %p152
        %p416 = pneg %p176
        %p417 = pneg %p173
        %p418 = pneg %p197
        %p419 = pneg %p194
        %p420 = pneg %p218
        %p421 = pneg %p215
        %p422 = pneg %p244
        %p423 = pneg %p241
        %s424 = sand.u32 %s231, 1
        %s425 = scalar_lea.sflag [#allocation4], %s424
        %s426 = sand.u32 %s231, 1
        %s427 = smul.addr %s426, 16
        %s428 = scalar_lea.vmem [#allocation13], %s427
        %v430 = vld [vmem:[%s368] sm:$0xf]
        %v431 = vld [vmem:[#allocation5] sm:$0xff]
        %v432 = vld [vmem:[#allocation5 + $0x8] sm:$0xff]
        %v433 = vld [vmem:[#allocation5 + $0x10] sm:$0xff]
        %v434 = vld [vmem:[#allocation5 + $0x18] sm:$0x11]
        %v435 = vld [vmem:[#allocation7] sm:$0x3]
        %v437 = vperm.slane %v435, 0
        %v438 = vperm.slane %v435, 1
        %v445 = vunpack.c.l.b16 %v431
        %v446 = vunpack.c.h.b16 %v431
        %v447 = vunpack.c.l.b16 %v432
        %v448 = vunpack.c.h.b16 %v432
        %v449 = vunpack.c.l.b16 %v433
        %v450 = vunpack.c.h.b16 %v433
        %v451 = vunpack.c.l.b16 %v434
        %v452 = vunpack.c.h.b16 %v434
        %v453 = vpack.c.b16 %v447, %v445
        %v454 = vpack.c.b16 %v448, %v446
        %v455 = vpack.c.b16 %v451, %v449
        %v456 = vpack.c.b16 %v452, %v450
        %vm459 = vcmask 203776
        %v461 = vsel %vm459, %v430, 0
        %vm463 = vcmask 1043456
        %vm464 = vcmask 1044480
        %v465 = vsel %vm463, 4294967295, 65535
        %v466 = vsel %vm464, %v465, 0
        %v468 = vand.u32 %v455, %v466
        %v471 = vand.u32 %v456, %v466
        %473 = vmatpush.bf16.msra.mxu0 0
        %474 = vmatpush.bf16.msra.mxu0 0
        %475 = vmatpush.bf16.msra.mxu0 0
        %476 = vmatpush.bf16.msra.mxu0 0
        %477 = vmatpush.bf16.msra.mxu0 0
        %478 = vmatpush.bf16.msra.mxu0 0
        %479 = vmatpush.bf16.msra.mxu0 %v468
        %480 = vmatpush.bf16.msra.mxu0 %v453
        %481 = vmatmul.bf16.gmra.mxu0 %v461
        %v482 = vpop.f32.mrf.mxu0
        %v483 = vadd.f32 %v437, %v482
        %v484 = vpop.f32.mrf.mxu0
        %485 = vdwg.mxu0
        %486 = vmatpush.bf16.msra.mxu0 0
        %487 = vmatpush.bf16.msra.mxu0 0
        %488 = vmatpush.bf16.msra.mxu0 0
        %489 = vmatpush.bf16.msra.mxu0 0
        %490 = vmatpush.bf16.msra.mxu0 0
        %491 = vmatpush.bf16.msra.mxu0 0
        %492 = vmatpush.bf16.msra.mxu0 %v471
        %493 = vmatpush.bf16.msra.mxu0 %v454
        %494 = vmatmul.bf16.gmra.mxu0 %v461
        %v495 = vpop.f32.mrf.mxu0
        %v496 = vadd.f32 %v438, %v495
        %v497 = vpop.f32.mrf.mxu0
        %498 = vdwg.mxu0
        %v499 = vxor.u32 %v483, 2147483648
        %v500 = vxor.u32 %v496, 2147483648
        %v501 = vmul.f32 %v499, 1.442695
        %v502 = vpow.pop %v501
        %v503 = vmul.f32 %v500, 1.442695
        %v504 = vpow.pop %v503
        %v505 = vadd.f32 %v502, 1.0
        %v506 = vadd.f32 %v504, 1.0
        %v507 = vrcp.pop %v505
        %v508 = vmul.f32 %v505, %v507
        %v509 = vsub.f32 1.0, %v508
        %v510 = vmul.f32 %v507, %v509
        %v511 = vadd.f32 %v507, %v510
        %vm512 = vweird.f32 %v505
        %vm513 = vweird.f32 %v507
        %vm514 = vmor %vm512, %vm513
        %v515 = vsel %vm514, %v507, %v511
        %v516 = vand.u32 2147483647, %v505
        %vm517 = vcmp.eq.f32.partialorder %v516, 8.507059e+37
        %v518 = vand.u32 %v505, 2147483648
        %v519 = vor.u32 1.1754944e-38, %v518
        %v520 = vsel %vm517, %v519, %v515
        %v521 = vmul.f32 1.0, %v520
        %v522 = vrcp.pop %v506
        %v523 = vmul.f32 %v506, %v522
        %v524 = vsub.f32 1.0, %v523
        %v525 = vmul.f32 %v522, %v524
        %v526 = vadd.f32 %v522, %v525
        %vm527 = vweird.f32 %v506
        %vm528 = vweird.f32 %v522
        %vm529 = vmor %vm527, %vm528
        %v530 = vsel %vm529, %v522, %v526
        %v531 = vand.u32 2147483647, %v506
        %vm532 = vcmp.eq.f32.partialorder %v531, 8.507059e+37
        %v533 = vand.u32 %v506, 2147483648
        %v534 = vor.u32 1.1754944e-38, %v533
        %v535 = vsel %vm532, %v534, %v530
        %v536 = vmul.f32 1.0, %v535
        %v537 = vpack.c.bf16 %v521, %v521
        %v538 = vpack.c.bf16 %v536, %v536
        %v539 = vld [vmem:[#allocation8] sm:$0xff]
        %v540 = vld [vmem:[#allocation8 + $0x8] sm:$0xff]
        %v541 = vld [vmem:[#allocation8 + $0x10] sm:$0xff]
        %v542 = vld [vmem:[#allocation8 + $0x18] sm:$0xff]
        %v543 = vld [vmem:[#allocation8 + $0x20] sm:$0xff]
        %v544 = vld [vmem:[#allocation8 + $0x28] sm:$0xff]
        %v545 = vld [vmem:[#allocation8 + $0x30] sm:$0xff]
        %v546 = vld [vmem:[#allocation8 + $0x38] sm:$0xff]
        %v547 = vld [vmem:[#allocation8 + $0x40] sm:$0xff]
        %v548 = vld [vmem:[#allocation8 + $0x48] sm:$0xff]
        %v549 = vld [vmem:[#allocation8 + $0x50] sm:$0xff]
        %v550 = vld [vmem:[#allocation8 + $0x58] sm:$0xff]
        %v551 = vld [vmem:[#allocation8 + $0x60] sm:$0xff]
        %v552 = vld [vmem:[#allocation8 + $0x68] sm:$0xff]
        %v553 = vld [vmem:[#allocation8 + $0x70] sm:$0xff]
        %v554 = vld [vmem:[#allocation8 + $0x78] sm:$0xff]
        %v555 = vld [vmem:[#allocation8 + $0x80] sm:$0xff]
        %v556 = vld [vmem:[#allocation8 + $0x88] sm:$0xff]
        %v557 = vld [vmem:[#allocation8 + $0x90] sm:$0xff]
        %v558 = vld [vmem:[#allocation8 + $0x98] sm:$0xff]
        %v559 = vld [vmem:[#allocation8 + $0xa0] sm:$0xff]
        %v560 = vld [vmem:[#allocation8 + $0xa8] sm:$0xff]
        %v561 = vld [vmem:[#allocation8 + $0xb0] sm:$0xff]
        %v562 = vld [vmem:[#allocation8 + $0xb8] sm:$0xff]
        %v563 = vld [vmem:[#allocation8 + $0xc0] sm:$0xff]
        %v564 = vld [vmem:[#allocation8 + $0xc8] sm:$0xff]
        %v565 = vld [vmem:[#allocation8 + $0xd0] sm:$0xff]
        %v566 = vld [vmem:[#allocation8 + $0xd8] sm:$0xff]
        %v567 = vld [vmem:[#allocation8 + $0xe0] sm:$0xff]
        %v568 = vld [vmem:[#allocation8 + $0xe8] sm:$0xff]
        %v569 = vld [vmem:[#allocation8 + $0xf0] sm:$0xff]
        %v570 = vld [vmem:[#allocation8 + $0xf8] sm:$0xff]
        %v571 = vld [vmem:[%s4] sm:$0x3]
        %v573 = vperm.slane %v571, 0
        %v574 = vperm.slane %v571, 1
        %v609 = vunpack.c.l.b16 %v539
        %v610 = vunpack.c.h.b16 %v539
        %v611 = vunpack.c.l.b16 %v540
        %v612 = vunpack.c.h.b16 %v540
        %v613 = vunpack.c.l.b16 %v541
        %v614 = vunpack.c.h.b16 %v541
        %v615 = vunpack.c.l.b16 %v542
        %v616 = vunpack.c.h.b16 %v542
        %v617 = vunpack.c.l.b16 %v543
        %v618 = vunpack.c.h.b16 %v543
        %v619 = vunpack.c.l.b16 %v544
        %v620 = vunpack.c.h.b16 %v544
        %v621 = vunpack.c.l.b16 %v545
        %v622 = vunpack.c.h.b16 %v545
        %v623 = vunpack.c.l.b16 %v546
        %v624 = vunpack.c.h.b16 %v546
        %v625 = vunpack.c.l.b16 %v547
        %v626 = vunpack.c.h.b16 %v547
        %v627 = vunpack.c.l.b16 %v548
        %v628 = vunpack.c.h.b16 %v548
        %v629 = vunpack.c.l.b16 %v549
        %v630 = vunpack.c.h.b16 %v549
        %v631 = vunpack.c.l.b16 %v550
        %v632 = vunpack.c.h.b16 %v550
        %v633 = vunpack.c.l.b16 %v551
        %v634 = vunpack.c.h.b16 %v551
        %v635 = vunpack.c.l.b16 %v552
        %v636 = vunpack.c.h.b16 %v552
        %v637 = vunpack.c.l.b16 %v553
        %v638 = vunpack.c.h.b16 %v553
        %v639 = vunpack.c.l.b16 %v554
        %v640 = vunpack.c.h.b16 %v554
        %v641 = vunpack.c.l.b16 %v555
        %v642 = vunpack.c.h.b16 %v555
        %v643 = vunpack.c.l.b16 %v556
        %v644 = vunpack.c.h.b16 %v556
        %v645 = vunpack.c.l.b16 %v557
        %v646 = vunpack.c.h.b16 %v557
        %v647 = vunpack.c.l.b16 %v558
        %v648 = vunpack.c.h.b16 %v558
        %v649 = vunpack.c.l.b16 %v559
        %v650 = vunpack.c.h.b16 %v559
        %v651 = vunpack.c.l.b16 %v560
        %v652 = vunpack.c.h.b16 %v560
        %v653 = vunpack.c.l.b16 %v561
        %v654 = vunpack.c.h.b16 %v561
        %v655 = vunpack.c.l.b16 %v562
        %v656 = vunpack.c.h.b16 %v562
        %v657 = vunpack.c.l.b16 %v563
        %v658 = vunpack.c.h.b16 %v563
        %v659 = vunpack.c.l.b16 %v564
        %v660 = vunpack.c.h.b16 %v564
        %v661 = vunpack.c.l.b16 %v565
        %v662 = vunpack.c.h.b16 %v565
        %v663 = vunpack.c.l.b16 %v566
        %v664 = vunpack.c.h.b16 %v566
        %v665 = vunpack.c.l.b16 %v567
        %v666 = vunpack.c.h.b16 %v567
        %v667 = vunpack.c.l.b16 %v568
        %v668 = vunpack.c.h.b16 %v568
        %v669 = vunpack.c.l.b16 %v569
        %v670 = vunpack.c.h.b16 %v569
        %v671 = vunpack.c.l.b16 %v570
        %v672 = vunpack.c.h.b16 %v570
        %v673 = vpack.c.b16 %v611, %v609
        %v674 = vpack.c.b16 %v612, %v610
        %v675 = vpack.c.b16 %v615, %v613
        %v676 = vpack.c.b16 %v616, %v614
        %v677 = vpack.c.b16 %v619, %v617
        %v678 = vpack.c.b16 %v620, %v618
        %v679 = vpack.c.b16 %v623, %v621
        %v680 = vpack.c.b16 %v624, %v622
        %v681 = vpack.c.b16 %v627, %v625
        %v682 = vpack.c.b16 %v628, %v626
        %v683 = vpack.c.b16 %v631, %v629
        %v684 = vpack.c.b16 %v632, %v630
        %v685 = vpack.c.b16 %v635, %v633
        %v686 = vpack.c.b16 %v636, %v634
        %v687 = vpack.c.b16 %v639, %v637
        %v688 = vpack.c.b16 %v640, %v638
        %v689 = vpack.c.b16 %v643, %v641
        %v690 = vpack.c.b16 %v644, %v642
        %v691 = vpack.c.b16 %v647, %v645
        %v692 = vpack.c.b16 %v648, %v646
        %v693 = vpack.c.b16 %v651, %v649
        %v694 = vpack.c.b16 %v652, %v650
        %v695 = vpack.c.b16 %v655, %v653
        %v696 = vpack.c.b16 %v656, %v654
        %v697 = vpack.c.b16 %v659, %v657
        %v698 = vpack.c.b16 %v660, %v658
        %v699 = vpack.c.b16 %v663, %v661
        %v700 = vpack.c.b16 %v664, %v662
        %v701 = vpack.c.b16 %v667, %v665
        %v702 = vpack.c.b16 %v668, %v666
        %v703 = vpack.c.b16 %v671, %v669
        %v704 = vpack.c.b16 %v672, %v670
        %737 = vmatpush.bf16.msra.mxu0 %v687
        %738 = vmatpush.bf16.msra.mxu0 %v685
        %739 = vmatpush.bf16.msra.mxu0 %v683
        %740 = vmatpush.bf16.msra.mxu0 %v681
        %741 = vmatpush.bf16.msra.mxu0 %v679
        %742 = vmatpush.bf16.msra.mxu0 %v677
        %743 = vmatpush.bf16.msra.mxu0 %v675
        %744 = vmatpush.bf16.msra.mxu0 %v673
        %745 = vmatmul.bf16.gmra.mxu0 %v537
        %v746 = vpop.f32.mrf.mxu0
        %v747 = vadd.f32 %v573, %v746
        %v748 = vpop.f32.mrf.mxu0
        %749 = vdwg.mxu0
        %750 = vmatpush.bf16.msra.mxu0 %v703
        %751 = vmatpush.bf16.msra.mxu0 %v701
        %752 = vmatpush.bf16.msra.mxu0 %v699
        %753 = vmatpush.bf16.msra.mxu0 %v697
        %754 = vmatpush.bf16.msra.mxu0 %v695
        %755 = vmatpush.bf16.msra.mxu0 %v693
        %756 = vmatpush.bf16.msra.mxu0 %v691
        %757 = vmatpush.bf16.msra.mxu0 %v689
        %758 = vmatmul.bf16.gmra.mxu0 %v538
        %v759 = vpop.f32.mrf.mxu0
        %v760 = vadd.f32 %v747, %v759
        %v761 = vpop.f32.mrf.mxu0
        %762 = vdwg.mxu0
        %763 = vmatpush.bf16.msra.mxu0 %v688
        %764 = vmatpush.bf16.msra.mxu0 %v686
        %765 = vmatpush.bf16.msra.mxu0 %v684
        %766 = vmatpush.bf16.msra.mxu0 %v682
        %767 = vmatpush.bf16.msra.mxu0 %v680
        %768 = vmatpush.bf16.msra.mxu0 %v678
        %769 = vmatpush.bf16.msra.mxu0 %v676
        %770 = vmatpush.bf16.msra.mxu0 %v674
        %771 = vmatmul.bf16.gmra.mxu0 %v537
        %v772 = vpop.f32.mrf.mxu0
        %v773 = vadd.f32 %v574, %v772
        %v774 = vpop.f32.mrf.mxu0
        %775 = vdwg.mxu0
        %776 = vmatpush.bf16.msra.mxu0 %v704
        %777 = vmatpush.bf16.msra.mxu0 %v702
        %778 = vmatpush.bf16.msra.mxu0 %v700
        %779 = vmatpush.bf16.msra.mxu0 %v698
        %780 = vmatpush.bf16.msra.mxu0 %v696
        %781 = vmatpush.bf16.msra.mxu0 %v694
        %782 = vmatpush.bf16.msra.mxu0 %v692
        %783 = vmatpush.bf16.msra.mxu0 %v690
        %784 = vmatmul.bf16.gmra.mxu0 %v538
        %v785 = vpop.f32.mrf.mxu0
        %v786 = vadd.f32 %v773, %v785
        %v787 = vpop.f32.mrf.mxu0
        %788 = vdwg.mxu0
        %v789 = vxor.u32 %v760, 2147483648
        %v790 = vxor.u32 %v786, 2147483648
        %v791 = vmul.f32 %v789, 1.442695
        %v792 = vpow.pop %v791
        %v793 = vmul.f32 %v790, 1.442695
        %v794 = vpow.pop %v793
        %v795 = vadd.f32 %v792, 1.0
        %v796 = vadd.f32 %v794, 1.0
        %v797 = vrcp.pop %v795
        %v798 = vmul.f32 %v795, %v797
        %v799 = vsub.f32 1.0, %v798
        %v800 = vmul.f32 %v797, %v799
        %v801 = vadd.f32 %v797, %v800
        %vm802 = vweird.f32 %v795
        %vm803 = vweird.f32 %v797
        %vm804 = vmor %vm802, %vm803
        %v805 = vsel %vm804, %v797, %v801
        %v806 = vand.u32 2147483647, %v795
        %vm807 = vcmp.eq.f32.partialorder %v806, 8.507059e+37
        %v808 = vand.u32 %v795, 2147483648
        %v809 = vor.u32 1.1754944e-38, %v808
        %v810 = vsel %vm807, %v809, %v805
        %v811 = vmul.f32 1.0, %v810
        %v812 = vrcp.pop %v796
        %v813 = vmul.f32 %v796, %v812
        %v814 = vsub.f32 1.0, %v813
        %v815 = vmul.f32 %v812, %v814
        %v816 = vadd.f32 %v812, %v815
        %vm817 = vweird.f32 %v796
        %vm818 = vweird.f32 %v812
        %vm819 = vmor %vm817, %vm818
        %v820 = vsel %vm819, %v812, %v816
        %v821 = vand.u32 2147483647, %v796
        %vm822 = vcmp.eq.f32.partialorder %v821, 8.507059e+37
        %v823 = vand.u32 %v796, 2147483648
        %v824 = vor.u32 1.1754944e-38, %v823
        %v825 = vsel %vm822, %v824, %v820
        %v826 = vmul.f32 1.0, %v825
        %v827 = vadd.f32 %v811, %v826
        %828 = vadd.xlane.f32.xlu0 %v827
        %v829 = vpop.xlane.xlu0 %828
        %v830 = vrcp.pop 256.0
        %v831 = vmul.f32 256.0, %v830
        %v832 = vsub.f32 1.0, %v831
        %v833 = vmul.f32 %v830, %v832
        %v834 = vadd.f32 %v830, %v833
        %vm835 = vweird.f32 %v830
        %v836 = vsel %vm835, %v830, %v834
        %v837 = vmul.f32 %v829, %v836
        %v838 = vsub.f32 %v811, %v837
        %v839 = vsub.f32 %v826, %v837
        %v840 = vmul.f32 %v838, %v838
        %v841 = vmul.f32 %v839, %v839
        %v842 = vadd.f32 %v840, %v841
        %843 = vadd.xlane.f32.xlu0 %v842
        %v844 = vpop.xlane.xlu0 %843
        %v845 = vmul.f32 %v844, %v836
        %v846 = vadd.f32 %v845, 1e-05
        %v847 = vrsqrt.pop %v846
        %v848 = vmul.f32 %v847, %v846
        %v849 = vmul.f32 %v848, %v847
        %v850 = vmul.f32 0.5, %v849
        %v851 = vsub.f32 1.5, %v850
        %v852 = vmul.f32 %v847, %v851
        %vm853 = vweird.f32 %v846
        %vm854 = vweird.f32 %v847
        %vm855 = vmor %vm853, %vm854
        %v856 = vsel %vm855, %v847, %v852
        %v857 = vmul.f32 %v838, %v856
        %v858 = vmul.f32 %v839, %v856
        %v859 = vld [vmem:[%s5] sm:$0x3]
        %v861 = vperm.slane %v859, 0
        %v862 = vperm.slane %v859, 1
        %v865 = vmul.f32 %v857, %v861
        %v866 = vmul.f32 %v858, %v862
        %v867 = vld [vmem:[#allocation10] sm:$0x3]
        %v869 = vperm.slane %v867, 0
        %v870 = vperm.slane %v867, 1
        %v873 = vadd.f32 %v865, %v869
        %v874 = vadd.f32 %v866, %v870
        %v875 = vpack.c.bf16 %v873, %v873
        %v876 = vpack.c.bf16 %v874, %v874
        %v877 = vld [vmem:[#allocation11] sm:$0xff]
        %v878 = vld [vmem:[#allocation11 + $0x8] sm:$0xff]
        %v879 = vld [vmem:[#allocation11 + $0x10] sm:$0xff]
        %v880 = vld [vmem:[#allocation11 + $0x18] sm:$0xff]
        %v881 = vld [vmem:[#allocation11 + $0x20] sm:$0xff]
        %v882 = vld [vmem:[#allocation11 + $0x28] sm:$0xff]
        %v883 = vld [vmem:[#allocation11 + $0x30] sm:$0xff]
        %v884 = vld [vmem:[#allocation11 + $0x38] sm:$0xff]
        %v885 = vld [vmem:[#allocation11 + $0x40] sm:$0xff]
        %v886 = vld [vmem:[#allocation11 + $0x48] sm:$0xff]
        %v887 = vld [vmem:[#allocation11 + $0x50] sm:$0xff]
        %v888 = vld [vmem:[#allocation11 + $0x58] sm:$0xff]
        %v889 = vld [vmem:[#allocation11 + $0x60] sm:$0xff]
        %v890 = vld [vmem:[#allocation11 + $0x68] sm:$0xff]
        %v891 = vld [vmem:[#allocation11 + $0x70] sm:$0xff]
        %v892 = vld [vmem:[#allocation11 + $0x78] sm:$0xff]
        %v893 = vld [vmem:[#allocation11 + $0x80] sm:$0xff]
        %v894 = vld [vmem:[#allocation11 + $0x88] sm:$0xff]
        %v895 = vld [vmem:[#allocation11 + $0x90] sm:$0xff]
        %v896 = vld [vmem:[#allocation11 + $0x98] sm:$0xff]
        %v897 = vld [vmem:[#allocation11 + $0xa0] sm:$0xff]
        %v898 = vld [vmem:[#allocation11 + $0xa8] sm:$0xff]
        %v899 = vld [vmem:[#allocation11 + $0xb0] sm:$0xff]
        %v900 = vld [vmem:[#allocation11 + $0xb8] sm:$0xff]
        %v901 = vld [vmem:[#allocation11 + $0xc0] sm:$0xff]
        %v902 = vld [vmem:[#allocation11 + $0xc8] sm:$0xff]
        %v903 = vld [vmem:[#allocation11 + $0xd0] sm:$0xff]
        %v904 = vld [vmem:[#allocation11 + $0xd8] sm:$0xff]
        %v905 = vld [vmem:[#allocation11 + $0xe0] sm:$0xff]
        %v906 = vld [vmem:[#allocation11 + $0xe8] sm:$0xff]
        %v907 = vld [vmem:[#allocation11 + $0xf0] sm:$0xff]
        %v908 = vld [vmem:[#allocation11 + $0xf8] sm:$0xff]
        %v909 = vld [vmem:[%s8] sm:$0x3]
        %v911 = vperm.slane %v909, 0
        %v912 = vperm.slane %v909, 1
        %v947 = vunpack.c.l.b16 %v877
        %v948 = vunpack.c.h.b16 %v877
        %v949 = vunpack.c.l.b16 %v878
        %v950 = vunpack.c.h.b16 %v878
        %v951 = vunpack.c.l.b16 %v879
        %v952 = vunpack.c.h.b16 %v879
        %v953 = vunpack.c.l.b16 %v880
        %v954 = vunpack.c.h.b16 %v880
        %v955 = vunpack.c.l.b16 %v881
        %v956 = vunpack.c.h.b16 %v881
        %v957 = vunpack.c.l.b16 %v882
        %v958 = vunpack.c.h.b16 %v882
        %v959 = vunpack.c.l.b16 %v883
        %v960 = vunpack.c.h.b16 %v883
        %v961 = vunpack.c.l.b16 %v884
        %v962 = vunpack.c.h.b16 %v884
        %v963 = vunpack.c.l.b16 %v885
        %v964 = vunpack.c.h.b16 %v885
        %v965 = vunpack.c.l.b16 %v886
        %v966 = vunpack.c.h.b16 %v886
        %v967 = vunpack.c.l.b16 %v887
        %v968 = vunpack.c.h.b16 %v887
        %v969 = vunpack.c.l.b16 %v888
        %v970 = vunpack.c.h.b16 %v888
        %v971 = vunpack.c.l.b16 %v889
        %v972 = vunpack.c.h.b16 %v889
        %v973 = vunpack.c.l.b16 %v890
        %v974 = vunpack.c.h.b16 %v890
        %v975 = vunpack.c.l.b16 %v891
        %v976 = vunpack.c.h.b16 %v891
        %v977 = vunpack.c.l.b16 %v892
        %v978 = vunpack.c.h.b16 %v892
        %v979 = vunpack.c.l.b16 %v893
        %v980 = vunpack.c.h.b16 %v893
        %v981 = vunpack.c.l.b16 %v894
        %v982 = vunpack.c.h.b16 %v894
        %v983 = vunpack.c.l.b16 %v895
        %v984 = vunpack.c.h.b16 %v895
        %v985 = vunpack.c.l.b16 %v896
        %v986 = vunpack.c.h.b16 %v896
        %v987 = vunpack.c.l.b16 %v897
        %v988 = vunpack.c.h.b16 %v897
        %v989 = vunpack.c.l.b16 %v898
        %v990 = vunpack.c.h.b16 %v898
        %v991 = vunpack.c.l.b16 %v899
        %v992 = vunpack.c.h.b16 %v899
        %v993 = vunpack.c.l.b16 %v900
        %v994 = vunpack.c.h.b16 %v900
        %v995 = vunpack.c.l.b16 %v901
        %v996 = vunpack.c.h.b16 %v901
        %v997 = vunpack.c.l.b16 %v902
        %v998 = vunpack.c.h.b16 %v902
        %v999 = vunpack.c.l.b16 %v903
        %v1000 = vunpack.c.h.b16 %v903
        %v1001 = vunpack.c.l.b16 %v904
        %v1002 = vunpack.c.h.b16 %v904
        %v1003 = vunpack.c.l.b16 %v905
        %v1004 = vunpack.c.h.b16 %v905
        %v1005 = vunpack.c.l.b16 %v906
        %v1006 = vunpack.c.h.b16 %v906
        %v1007 = vunpack.c.l.b16 %v907
        %v1008 = vunpack.c.h.b16 %v907
        %v1009 = vunpack.c.l.b16 %v908
        %v1010 = vunpack.c.h.b16 %v908
        %v1011 = vpack.c.b16 %v949, %v947
        %v1012 = vpack.c.b16 %v950, %v948
        %v1013 = vpack.c.b16 %v953, %v951
        %v1014 = vpack.c.b16 %v954, %v952
        %v1015 = vpack.c.b16 %v957, %v955
        %v1016 = vpack.c.b16 %v958, %v956
        %v1017 = vpack.c.b16 %v961, %v959
        %v1018 = vpack.c.b16 %v962, %v960
        %v1019 = vpack.c.b16 %v965, %v963
        %v1020 = vpack.c.b16 %v966, %v964
        %v1021 = vpack.c.b16 %v969, %v967
        %v1022 = vpack.c.b16 %v970, %v968
        %v1023 = vpack.c.b16 %v973, %v971
        %v1024 = vpack.c.b16 %v974, %v972
        %v1025 = vpack.c.b16 %v977, %v975
        %v1026 = vpack.c.b16 %v978, %v976
        %v1027 = vpack.c.b16 %v981, %v979
        %v1028 = vpack.c.b16 %v982, %v980
        %v1029 = vpack.c.b16 %v985, %v983
        %v1030 = vpack.c.b16 %v986, %v984
        %v1031 = vpack.c.b16 %v989, %v987
        %v1032 = vpack.c.b16 %v990, %v988
        %v1033 = vpack.c.b16 %v993, %v991
        %v1034 = vpack.c.b16 %v994, %v992
        %v1035 = vpack.c.b16 %v997, %v995
        %v1036 = vpack.c.b16 %v998, %v996
        %v1037 = vpack.c.b16 %v1001, %v999
        %v1038 = vpack.c.b16 %v1002, %v1000
        %v1039 = vpack.c.b16 %v1005, %v1003
        %v1040 = vpack.c.b16 %v1006, %v1004
        %v1041 = vpack.c.b16 %v1009, %v1007
        %v1042 = vpack.c.b16 %v1010, %v1008
        %1075 = vmatpush.bf16.msra.mxu0 %v1025
        %1076 = vmatpush.bf16.msra.mxu0 %v1023
        %1077 = vmatpush.bf16.msra.mxu0 %v1021
        %1078 = vmatpush.bf16.msra.mxu0 %v1019
        %1079 = vmatpush.bf16.msra.mxu0 %v1017
        %1080 = vmatpush.bf16.msra.mxu0 %v1015
        %1081 = vmatpush.bf16.msra.mxu0 %v1013
        %1082 = vmatpush.bf16.msra.mxu0 %v1011
        %1083 = vmatmul.bf16.gmra.mxu0 %v875
        %v1084 = vpop.f32.mrf.mxu0
        %v1085 = vadd.f32 %v911, %v1084
        %v1086 = vpop.f32.mrf.mxu0
        %1087 = vdwg.mxu0
        %1088 = vmatpush.bf16.msra.mxu0 %v1041
        %1089 = vmatpush.bf16.msra.mxu0 %v1039
        %1090 = vmatpush.bf16.msra.mxu0 %v1037
        %1091 = vmatpush.bf16.msra.mxu0 %v1035
        %1092 = vmatpush.bf16.msra.mxu0 %v1033
        %1093 = vmatpush.bf16.msra.mxu0 %v1031
        %1094 = vmatpush.bf16.msra.mxu0 %v1029
        %1095 = vmatpush.bf16.msra.mxu0 %v1027
        %1096 = vmatmul.bf16.gmra.mxu0 %v876
        %v1097 = vpop.f32.mrf.mxu0
        %v1098 = vadd.f32 %v1085, %v1097
        %v1099 = vpop.f32.mrf.mxu0
        %1100 = vdwg.mxu0
        %1101 = vmatpush.bf16.msra.mxu0 %v1026
        %1102 = vmatpush.bf16.msra.mxu0 %v1024
        %1103 = vmatpush.bf16.msra.mxu0 %v1022
        %1104 = vmatpush.bf16.msra.mxu0 %v1020
        %1105 = vmatpush.bf16.msra.mxu0 %v1018
        %1106 = vmatpush.bf16.msra.mxu0 %v1016
        %1107 = vmatpush.bf16.msra.mxu0 %v1014
        %1108 = vmatpush.bf16.msra.mxu0 %v1012
        %1109 = vmatmul.bf16.gmra.mxu0 %v875
        %v1110 = vpop.f32.mrf.mxu0
        %v1111 = vadd.f32 %v912, %v1110
        %v1112 = vpop.f32.mrf.mxu0
        %1113 = vdwg.mxu0
        %1114 = vmatpush.bf16.msra.mxu0 %v1042
        %1115 = vmatpush.bf16.msra.mxu0 %v1040
        %1116 = vmatpush.bf16.msra.mxu0 %v1038
        %1117 = vmatpush.bf16.msra.mxu0 %v1036
        %1118 = vmatpush.bf16.msra.mxu0 %v1034
        %1119 = vmatpush.bf16.msra.mxu0 %v1032
        %1120 = vmatpush.bf16.msra.mxu0 %v1030
        %1121 = vmatpush.bf16.msra.mxu0 %v1028
        %1122 = vmatmul.bf16.gmra.mxu0 %v876
        %v1123 = vpop.f32.mrf.mxu0
        %v1124 = vadd.f32 %v1111, %v1123
        %v1125 = vpop.f32.mrf.mxu0
        %1126 = vdwg.mxu0
        %1127 = vst [vmem:[%s428] sm:$0xff] %v1098
        %1128 = vst [vmem:[%s428 + $0x8] sm:$0xff] %v1124
        %s1129 = sand.u32 %s231, 1
        %s1130 = scalar_lea.sflag [#allocation4], %s1129
        %s1131 = sand.u32 %s231, 1
        %s1132 = smul.addr %s1131, 16
        %s1133 = scalar_lea.vmem [#allocation13], %s1132
        // Predicated region
        $region81: #{tpu_custom_call.1} parent=55 // pred_check
          %p1134 = pneg %p241
        $region82: #{tpu_custom_call.1} parent=55 // pred_check_branch
          %1136 = sbr.rel (%p1134) target = $region84
        $region83: #{tpu_custom_call.1} parent=55 // pred_region
          %1138 = vsyncadd %s1130, 0
          %s1139 = smul.addr %s29, 2
          %s1140 = smul.addr %s1139, 8
          %s1141 = scalar_lea.hbm %s9, %s1140
          %s1143 = sshll.u32 %s1133, 4
          %s1144 = int_to_ptr.vmem [resolvable:$true] %s1143
          %s1145 = sshll.u32 %s1141, 4
          %s1146 = int_to_ptr.hbm [resolvable:$true] %s1145
          %1148 = dma.vmem_to_hbm [thread:$0]  %s1144, 256, %s1146, %s1130
        $region84: #{tpu_custom_call.1} parent=55 // pred_fallthru
          _
      $region56: #{tpu_custom_call.1} parent=5 // pred_fallthru
        _
      %p1149 = scmp.le.s32.totalorder 2, %s24
      // Predicated region
      $region85: #{tpu_custom_call.1} parent=5 // pred_check
        %p1150 = pneg %p1149
      $region86: #{tpu_custom_call.1} parent=5 // pred_check_branch
        %1152 = sbr.rel (%p1150) target = $region88
      $region87: #{tpu_custom_call.1} parent=5 // pred_region
        %s1153 = ssub.s32 %s24, 2
        // Predicated region
        $region89: #{tpu_custom_call.1} parent=87 // pred_check
          %p1154 = pneg %p247
        $region90: #{tpu_custom_call.1} parent=87 // pred_check_branch
          %1156 = sbr.rel (%p1154) target = $region92
        $region91: #{tpu_custom_call.1} parent=87 // pred_region
          %s1157 = sand.u32 %s232, 1
          %s1158 = scalar_lea.sflag [#allocation4], %s1157
          %s1159 = sand.u32 %s232, 1
          %s1160 = smul.addr %s1159, 16
          %s1161 = scalar_lea.vmem [#allocation13], %s1160
          %1163 = dma.done %s1158, 256
        $region92: #{tpu_custom_call.1} parent=87 // pred_fallthru
          _
      $region88: #{tpu_custom_call.1} parent=5 // pred_fallthru
        _
    $region6: #{tpu_custom_call.1} parent=1 // loop_footer
      %s28 = sadd.s32 1, %s24
    $region7: #{tpu_custom_call.1} parent=1 // loop_footer_branch
      %23 = sbr.rel target = $region3
    $region8: #{tpu_custom_call.1} parent=1 // loop_exit
      _
    %1164 = vsyncpa [#allocation3], 1
    %s1165 = scalar_lea.sflag [#allocation3], 1
    %1166 = vsyncpa %s1165, 1
    %1167 = vsyncpa [#allocation6], 1
    %1168 = vsyncpa [#allocation9], 1
    %1169 = vsyncpa [#allocation12], 1
    %1170 = vsyncpa [#allocation4], 1
    %s1171 = scalar_lea.sflag [#allocation4], 1
    %1172 = vsyncpa %s1171, 1

</llo_original>
